<compile_context>
chip_gen: v7x
topology: tpu7x:2x2x1
jax: 0.10.0
libtpu: 0.0.40
codegen_flags: <defaults>
</compile_context>

<pallas_src>
import functools

import jax
import jax.numpy as jnp
from jax.experimental import pallas as pl
from jax.experimental.pallas import tpu as pltpu


_SUBLANE = 16  # multiple that covers bf16 (16) and f32 (8) sublane packing


def _round_up(n, m):
    return ((n + m - 1) // m) * m


def _choose_tiling(B, max_batch_tile):
    """Pick (padded_batch, batch_tile).  Pure python on static shapes."""
    if B <= _SUBLANE:
        # Single full-dim tile; block dims equal to full array dims are legal.
        return B, B
    B_p = _round_up(B, _SUBLANE)
    if B_p <= max_batch_tile:
        half = B_p // 2
        if half % _SUBLANE == 0:
            # >= 2 parallel tiles -> both v7x TensorCores get work.
            return B_p, half
        return B_p, B_p
    tm = max_batch_tile
    return _round_up(B_p, tm), tm


def two_layer_nn_kernel(x_ref, w1t_ref, b1_ref, w2t_ref, b2_ref, out_ref):
    # x_ref:   [TM, D_in]   f32 (native; cast to bf16 here, hidden under DMA)
    # w1t_ref: [D_in, H]    bf16     b1_ref: [1, H]     f32
    # w2t_ref: [H, D_out]   bf16     b2_ref: [1, D_out] f32
    # out_ref: [TM, D_out]  out dtype (bf16 or f32)
    x = x_ref[...].astype(w1t_ref.dtype)
    # fc1 on the MXU: bf16 x bf16 -> f32 accumulate.
    h = jnp.dot(x, w1t_ref[...], preferred_element_type=jnp.float32)
    # bias + ReLU in f32 on the VPU (v5e has no bf16 VPU).
    h = jnp.maximum(h + b1_ref[...], 0.0)
    # fc2: activation back to bf16 for the MXU, f32 accumulate.
    o = jnp.dot(h.astype(w2t_ref.dtype), w2t_ref[...],
                preferred_element_type=jnp.float32)
    out_ref[...] = (o + b2_ref[...]).astype(out_ref.dtype)


def prepare_params(w1, b1, w2, b2, compute_dtype=jnp.bfloat16):
    """One-time prep: transpose + bf16-cast weights, reshape biases to rows.

    No feature-dim padding (kept lane-unpadded on purpose: the kernel is
    HBM-bound and full-dim blocks keep DMAs contiguous without extra bytes).
    """
    w1t = jnp.asarray(w1).T.astype(compute_dtype)           # (D_in, H)
    b1r = jnp.asarray(b1, dtype=jnp.float32).reshape(1, -1)  # (1, H)
    w2t = jnp.asarray(w2).T.astype(compute_dtype)           # (H, D_out)
    b2r = jnp.asarray(b2, dtype=jnp.float32).reshape(1, -1)  # (1, D_out)
    return (w1t, b1r, w2t, b2r)


@functools.partial(jax.jit, static_argnames=("max_batch_tile", "out_dtype"))
def two_layer_nn(x, params, *, max_batch_tile=2048, out_dtype=jnp.bfloat16):
    """x: [B, D_in] float32; params from prepare_params.  Returns [B, D_out]."""
    if max_batch_tile % _SUBLANE != 0:
        raise ValueError(f"max_batch_tile must be a multiple of {_SUBLANE}")

    w1t, b1r, w2t, b2r = params
    B, D_in = x.shape
    H = w1t.shape[1]
    D_out = w2t.shape[1]
    assert w1t.shape[0] == D_in and w2t.shape[0] == H
    assert b1r.shape == (1, H) and b2r.shape == (1, D_out)

    # Batch padding only (static shapes -> static pad widths).
    B_p, tm = _choose_tiling(B, max_batch_tile)
    if B_p != B:
        x = jnp.pad(x, ((0, B_p - B), (0, 0)))
    grid = (B_p // tm,)

    out_p = pl.pallas_call(
        two_layer_nn_kernel,
        out_shape=jax.ShapeDtypeStruct((B_p, D_out), out_dtype),
        grid=grid,
        in_specs=[
            pl.BlockSpec((tm, D_in), lambda i: (i, 0)),     # x tile (pipelined)
            pl.BlockSpec((D_in, H), lambda i: (0, 0)),      # W1^T resident
            pl.BlockSpec((1, H), lambda i: (0, 0)),         # b1 resident
            pl.BlockSpec((H, D_out), lambda i: (0, 0)),     # W2^T resident
            pl.BlockSpec((1, D_out), lambda i: (0, 0)),     # b2 resident
        ],
        out_specs=pl.BlockSpec((tm, D_out), lambda i: (i, 0)),
        compiler_params=pltpu.CompilerParams(
            dimension_semantics=("parallel",),  # batch tiles are independent
        ),
    )(x, w1t, b1r, w2t, b2r)

    if B_p != B:
        out_p = out_p[:B]   # strip batch padding only; no lane slicing needed
    return out_p


def two_layer_nn_ref_f32(x, w1, b1, w2, b2):
    h = jnp.maximum(x @ w1.T + b1, 0.0)
    return h @ w2.T + b2


def two_layer_nn_ref_bf16(x, w1, b1, w2, b2):
    # Reference matching the kernel's quantization: bf16 operands, f32 accumulate.
    xb = x.astype(jnp.bfloat16)
    w1b = w1.astype(jnp.bfloat16)
    h = jnp.dot(xb, w1b.T, preferred_element_type=jnp.float32) + b1
    h = jnp.maximum(h, 0.0)
    w2b = w2.astype(jnp.bfloat16)
    return jnp.dot(h.astype(jnp.bfloat16), w2b.T,
                   preferred_element_type=jnp.float32) + b2


if __name__ == "__main__":
    # Small shapes consistent with the module: input_dim=16, hidden=32, output=8.
    batch, input_dim, hidden_dim, output_dim = 8, 16, 32, 8

    key = jax.random.PRNGKey(0)
    kx, kw1, kb1, kw2, kb2 = jax.random.split(key, 5)

    x = jax.random.normal(kx, (batch, input_dim), dtype=jnp.float32)

    # Deterministic init mimicking nn.Linear's U(-1/sqrt(fan_in), 1/sqrt(fan_in)).
    bound1 = 1.0 / (input_dim ** 0.5)
    w1 = jax.random.uniform(kw1, (hidden_dim, input_dim),
                            minval=-bound1, maxval=bound1, dtype=jnp.float32)
    b1 = jax.random.uniform(kb1, (hidden_dim,),
                            minval=-bound1, maxval=bound1, dtype=jnp.float32)

    bound2 = 1.0 / (hidden_dim ** 0.5)
    w2 = jax.random.uniform(kw2, (output_dim, hidden_dim),
                            minval=-bound2, maxval=bound2, dtype=jnp.float32)
    b2 = jax.random.uniform(kb2, (output_dim,),
                            minval=-bound2, maxval=bound2, dtype=jnp.float32)

    # One-time parameter prep (transpose + bf16 cast, no padding).
    params = prepare_params(w1, b1, w2, b2)

    # --- f32-output run: tight check against a bf16-operand-matched reference.
    out = two_layer_nn(x, params, out_dtype=jnp.float32)
    out = jax.block_until_ready(out)
    assert out.shape == (batch, output_dim)

    ref_q = two_layer_nn_ref_bf16(x, w1, b1, w2, b2)
    assert jnp.allclose(out, ref_q, atol=1e-4, rtol=1e-4), "mismatch vs bf16-matched ref"

    ref_f32 = two_layer_nn_ref_f32(x, w1, b1, w2, b2)
    assert jnp.allclose(out, ref_f32, atol=5e-2, rtol=5e-2), "mismatch vs f32 ref"

    # --- bf16-output run (default): halves writeback bytes, single final round.
    out_bf16 = jax.block_until_ready(two_layer_nn(x, params))
    assert out_bf16.dtype == jnp.bfloat16
    assert jnp.allclose(out_bf16.astype(jnp.float32), ref_f32,
                        atol=6e-2, rtol=6e-2), "bf16-output mismatch"

    # --- non-aligned batch: exercises batch padding + >=2 parallel tiles + slicing.
    x_odd = jax.random.normal(kx, (19, input_dim), dtype=jnp.float32)
    out_odd = jax.block_until_ready(
        two_layer_nn(x_odd, params, out_dtype=jnp.float32))
    assert out_odd.shape == (19, output_dim)
    ref_odd = two_layer_nn_ref_bf16(x_odd, w1, b1, w2, b2)
    assert jnp.allclose(out_odd, ref_odd, atol=1e-4, rtol=1e-4), "odd-batch mismatch"

    print("KERNEL_OK")
</pallas_src>

<mosaic_0001>
module attributes {stable_mosaic.version = 11 : i64} {
  func.func @two_layer_nn_kernel(%arg0: i32, %arg1: memref<8x16xf32, #tpu.memory_space<vmem>>, %arg2: memref<16x32xbf16, #tpu.memory_space<vmem>>, %arg3: memref<1x32xf32, #tpu.memory_space<vmem>>, %arg4: memref<32x8xbf16, #tpu.memory_space<vmem>>, %arg5: memref<1x8xf32, #tpu.memory_space<vmem>>, %arg6: memref<8x8xf32, #tpu.memory_space<vmem>>) attributes {dimension_semantics = [#tpu.dimension_semantics<parallel>], iteration_bounds = array<i64: 1>, scalar_prefetch = 0 : i64, scratch_operands = 0 : i64, tpu.core_type = #tpu.core_type<tc>, window_params = [{transform_indices = @transform_0, window_bounds = array<i64: 8, 16>}, {pipeline_mode = #tpu.pipeline_mode<synchronous>, transform_indices = @transform_1, window_bounds = array<i64: 16, 32>}, {pipeline_mode = #tpu.pipeline_mode<synchronous>, transform_indices = @transform_2, window_bounds = array<i64: 1, 32>}, {pipeline_mode = #tpu.pipeline_mode<synchronous>, transform_indices = @transform_3, window_bounds = array<i64: 32, 8>}, {pipeline_mode = #tpu.pipeline_mode<synchronous>, transform_indices = @transform_4, window_bounds = array<i64: 1, 8>}, {transform_indices = @transform_5, window_bounds = array<i64: 8, 8>}]} {
    %c0 = arith.constant 0 : index
    %c0_0 = arith.constant 0 : index
    %0 = vector.load %arg1[%c0, %c0_0] : memref<8x16xf32, #tpu.memory_space<vmem>>, vector<8x16xf32>
    %1 = arith.truncf %0 : vector<8x16xf32> to vector<8x16xbf16>
    %c0_1 = arith.constant 0 : index
    %c0_2 = arith.constant 0 : index
    %2 = vector.load %arg2[%c0_1, %c0_2] : memref<16x32xbf16, #tpu.memory_space<vmem>>, vector<16x32xbf16>
    %cst = arith.constant dense<0.000000e+00> : vector<8x32xf32>
    %3 = tpu.matmul %1, %2, %cst {dimension_numbers = #tpu.dot_dimension_numbers<[1], [0], [0], [1], [0, 0, 1, 1], [], []>} : vector<8x16xbf16>, vector<16x32xbf16>, vector<8x32xf32> -> vector<8x32xf32>
    %c0_3 = arith.constant 0 : index
    %c0_4 = arith.constant 0 : index
    %4 = vector.load %arg3[%c0_3, %c0_4] : memref<1x32xf32, #tpu.memory_space<vmem>>, vector<1x32xf32>
    %5 = vector.broadcast %4 : vector<1x32xf32> to vector<8x32xf32>
    %6 = arith.addf %3, %5 : vector<8x32xf32>
    %cst_5 = arith.constant 0.000000e+00 : f32
    %7 = vector.broadcast %cst_5 : f32 to vector<8x32xf32>
    %8 = arith.maximumf %6, %7 : vector<8x32xf32>
    %9 = arith.truncf %8 : vector<8x32xf32> to vector<8x32xbf16>
    %c0_6 = arith.constant 0 : index
    %c0_7 = arith.constant 0 : index
    %10 = vector.load %arg4[%c0_6, %c0_7] : memref<32x8xbf16, #tpu.memory_space<vmem>>, vector<32x8xbf16>
    %cst_8 = arith.constant dense<0.000000e+00> : vector<8x8xf32>
    %11 = tpu.matmul %9, %10, %cst_8 {dimension_numbers = #tpu.dot_dimension_numbers<[1], [0], [0], [1], [0, 0, 1, 1], [], []>} : vector<8x32xbf16>, vector<32x8xbf16>, vector<8x8xf32> -> vector<8x8xf32>
    %c0_9 = arith.constant 0 : index
    %c0_10 = arith.constant 0 : index
    %12 = vector.load %arg5[%c0_9, %c0_10] : memref<1x8xf32, #tpu.memory_space<vmem>>, vector<1x8xf32>
    %13 = vector.broadcast %12 : vector<1x8xf32> to vector<8x8xf32>
    %14 = arith.addf %11, %13 : vector<8x8xf32>
    %c0_11 = arith.constant 0 : index
    %c0_12 = arith.constant 0 : index
    %15 = vector.load %arg6[%c0_11, %c0_12] : memref<8x8xf32, #tpu.memory_space<vmem>>, vector<8x8xf32>
    tpu.vector_store %arg6[%c0_11, %c0_12], %14 {strides = array<i32>} : memref<8x8xf32, #tpu.memory_space<vmem>>, vector<8x8xf32>,
    return
  }
  func.func @transform_0(%arg0: i32) -> (i32, i32) {
    %c0_i32 = arith.constant 0 : i32
    %c0_i32_0 = arith.constant 0 : i32
    return %arg0, %c0_i32 : i32, i32
  }
  func.func @transform_1(%arg0: i32) -> (i32, i32) {
    %c0_i32 = arith.constant 0 : i32
    %c0_i32_0 = arith.constant 0 : i32
    %c0_i32_1 = arith.constant 0 : i32
    return %c0_i32, %c0_i32_0 : i32, i32
  }
  func.func @transform_2(%arg0: i32) -> (i32, i32) {
    %c0_i32 = arith.constant 0 : i32
    %c0_i32_0 = arith.constant 0 : i32
    %c0_i32_1 = arith.constant 0 : i32
    return %c0_i32, %c0_i32_0 : i32, i32
  }
  func.func @transform_3(%arg0: i32) -> (i32, i32) {
    %c0_i32 = arith.constant 0 : i32
    %c0_i32_0 = arith.constant 0 : i32
    %c0_i32_1 = arith.constant 0 : i32
    return %c0_i32, %c0_i32_0 : i32, i32
  }
  func.func @transform_4(%arg0: i32) -> (i32, i32) {
    %c0_i32 = arith.constant 0 : i32
    %c0_i32_0 = arith.constant 0 : i32
    %c0_i32_1 = arith.constant 0 : i32
    return %c0_i32, %c0_i32_0 : i32, i32
  }
  func.func @transform_5(%arg0: i32) -> (i32, i32) {
    %c0_i32 = arith.constant 0 : i32
    %c0_i32_0 = arith.constant 0 : i32
    return %arg0, %c0_i32 : i32, i32
  }
}

</mosaic_0001>

<llo_original>
// kernel: two_layer_nn.1
$region0: #{two_layer_nn.1}
  #allocation0 [shape = 'u32[]', space=smem, size = 0x4, offset = 0x4, fixed_abs, tag = 'smem constant byte address 0x4 - core index']
  #allocation1 [shape = 'u32[144,128]{1,0:T(1,128)}', space=vmem, size = 0x12000, scoped, tag = 'internal scratch']
  %s0 = inlined_call_operand.vmem [shape: f32[8,16], index: 0, kind: input, shape index: {}]
  %s1 = inlined_call_operand.vmem [shape: bf16[16,32], index: 1, kind: input, shape index: {}]
  %s2 = inlined_call_operand.vmem [shape: f32[1,32], index: 2, kind: input, shape index: {}]
  %s3 = inlined_call_operand.vmem [shape: bf16[32,8], index: 3, kind: input, shape index: {}]
  %s4 = inlined_call_operand.vmem [shape: f32[1,8], index: 4, kind: input, shape index: {}]
  %s5 = inlined_call_operand.hbm [shape: f32[8,8], index: 5, kind: output, shape index: {}]
  %s6 = sld [smem:[#allocation0]]
  $region30: #{two_layer_nn.1} parent=0
    _
  %s8 = ssub.s32 1, %s6
  %s9 = scalar_select 0, %s8, %s6
  $region1: #{two_layer_nn.1} parent=0
    #allocation2 [shape = 'u8[4096]{0}', space=vmem, size = 0x1000, scoped, tag = 'output window, operand 0, single buffered']
    #allocation3 [shape = 's32[1]{0}', space=sflag, size = 0x4, scoped, tag = 'scoped memory for two_layer_nn.1']
    %10 = vsyncpa [#allocation3], 0
    // Predicated region
    $region2: #{two_layer_nn.1} parent=1 // pred_check
      _
    $region3: #{two_layer_nn.1} parent=1 // pred_check_branch
      %12 = sbr.rel (0) target = $region5
    $region4: #{two_layer_nn.1} parent=1 // pred_region
      _
    $region5: #{two_layer_nn.1} parent=1 // pred_fallthru
      _
    // Predicated region
    $region6: #{two_layer_nn.1} parent=1 // pred_check
      _
    $region7: #{two_layer_nn.1} parent=1 // pred_check_branch
      %14 = sbr.rel (0) target = $region9
    $region8: #{two_layer_nn.1} parent=1 // pred_region
      _
    $region9: #{two_layer_nn.1} parent=1 // pred_fallthru
      _
    // Predicated region
    $region10: #{two_layer_nn.1} parent=1 // pred_check
      _
    $region11: #{two_layer_nn.1} parent=1 // pred_check_branch
      %16 = sbr.rel (0) target = $region13
    $region12: #{two_layer_nn.1} parent=1 // pred_region
      _
    $region13: #{two_layer_nn.1} parent=1 // pred_fallthru
      _
    // Predicated region
    $region14: #{two_layer_nn.1} parent=1 // pred_check
      _
    $region15: #{two_layer_nn.1} parent=1 // pred_check_branch
      %18 = sbr.rel (0) target = $region17
    $region16: #{two_layer_nn.1} parent=1 // pred_region
      _
    $region17: #{two_layer_nn.1} parent=1 // pred_fallthru
      _
    // Predicated region
    $region18: #{two_layer_nn.1} parent=1 // pred_check
      _
    $region19: #{two_layer_nn.1} parent=1 // pred_check_branch
      %20 = sbr.rel (0) target = $region21
    $region20: #{two_layer_nn.1} parent=1 // pred_region
      _
    $region21: #{two_layer_nn.1} parent=1 // pred_fallthru
      _
    %v22 = vld [vmem:[%s0] sm:$0xff]
    %v23 = vpack.c.bf16 %v22, %v22
    %v24 = vld [vmem:[%s1] sm:$0xf]
    %v25 = vld [vmem:[%s1 + $0x4] sm:$0xf]
    %v26 = vld [vmem:[%s2] sm:$0x1]
    %v28 = vlaneseq
    %v29 = vshrl.u32 %v28, 7
    %v30 = vsub.s32 0, %v29
    %v31 = vrot.slane %v26, %v30
    %v35 = vunpack.c.l.b16 %v24
    %v36 = vunpack.c.l.b16 %v25
    %v37 = vpack.c.b16 %v36, %v35
    %vm39 = vcmask 130048
    %v41 = vsel %vm39, %v23, 0
    %43 = vmatprep.subr.bf16.mxu0 0
    %44 = vmatpush1.bf16.msra.mxu0 %v37
    %45 = vmatprep.subr.bf16.mxu0 0
    %46 = vmatpush1.bf16.msra.mxu0 0
    %47 = vmatprep.subr.bf16.mxu0 0
    %48 = vmatpush1.bf16.msra.mxu0 0
    %49 = vmatprep.subr.bf16.mxu0 0
    %50 = vmatpush1.bf16.msra.mxu0 0
    %51 = vmatprep.subr.bf16.mxu0 0
    %52 = vmatpush1.bf16.msra.mxu0 0
    %53 = vmatprep.subr.bf16.mxu0 0
    %54 = vmatpush1.bf16.msra.mxu0 0
    %55 = vmatprep.subr.bf16.mxu0 0
    %56 = vmatpush1.bf16.msra.mxu0 0
    %57 = vmatprep.subr.bf16.mxu0 0
    %58 = vmatpush1.bf16.msra.mxu0 0
    %59 = vmatprep.subr.bf16.mxu0 0
    %60 = vmatpush1.bf16.msra.mxu0 0
    %61 = vmatprep.subr.bf16.mxu0 0
    %62 = vmatpush1.bf16.msra.mxu0 0
    %63 = vmatprep.subr.bf16.mxu0 0
    %64 = vmatpush1.bf16.msra.mxu0 0
    %65 = vmatprep.subr.bf16.mxu0 0
    %66 = vmatpush1.bf16.msra.mxu0 0
    %67 = vmatprep.subr.bf16.mxu0 0
    %68 = vmatpush1.bf16.msra.mxu0 0
    %69 = vmatprep.subr.bf16.mxu0 0
    %70 = vmatpush1.bf16.msra.mxu0 0
    %71 = vmatprep.subr.bf16.mxu0 0
    %72 = vmatpush1.bf16.msra.mxu0 0
    %73 = vmatprep.subr.bf16.mxu0 0
    %74 = vmatpush1.bf16.msra.mxu0 0
    %75 = vmatprep.mubr.bf16.mxu0 0
    %76 = vmatmul.mubr.bf16.gmra.mrb[0].mxu0 %v41
    %v77 = vpop.f32.mrb[0].mxu0
    %v78 = vadd.f32 %v31, %v77
    %v79 = vpop.f32.mrb[0].mxu0
    %v80 = vpop.f32.mrb[0].mxu0
    %v81 = vpop.f32.mrb[0].mxu0
    %82 = vdwg.mxu0
    %v83 = vmax.f32 %v78, 0.0
    %v84 = vpack.c.bf16 %v83, %v83
    %v85 = vld [vmem:[%s3] sm:$0xf]
    %v86 = vld [vmem:[%s3 + $0x4] sm:$0xf]
    %v87 = vld [vmem:[%s3 + $0x8] sm:$0xf]
    %v88 = vld [vmem:[%s3 + $0xc] sm:$0xf]
    %v89 = vld [vmem:[%s4] sm:$0x1]
    %v91 = vlaneseq
    %v92 = vshrl.u32 %v91, 7
    %v93 = vsub.s32 0, %v92
    %v94 = vrot.slane %v89, %v93
    %v100 = vunpack.c.l.b16 %v85
    %v101 = vunpack.c.l.b16 %v86
    %v102 = vunpack.c.l.b16 %v87
    %v103 = vunpack.c.l.b16 %v88
    %v104 = vpack.c.b16 %v101, %v100
    %v105 = vpack.c.b16 %v103, %v102
    %vm108 = vcmask 261120
    %v110 = vsel %vm108, %v84, 0
    %112 = vmatprep.subr.bf16.mxu0 0
    %113 = vmatpush1.bf16.msra.mxu0 %v104
    %114 = vmatprep.subr.bf16.mxu0 0
    %115 = vmatpush1.bf16.msra.mxu0 %v105
    %116 = vmatprep.subr.bf16.mxu0 0
    %117 = vmatpush1.bf16.msra.mxu0 0
    %118 = vmatprep.subr.bf16.mxu0 0
    %119 = vmatpush1.bf16.msra.mxu0 0
    %120 = vmatprep.subr.bf16.mxu0 0
    %121 = vmatpush1.bf16.msra.mxu0 0
    %122 = vmatprep.subr.bf16.mxu0 0
    %123 = vmatpush1.bf16.msra.mxu0 0
    %124 = vmatprep.subr.bf16.mxu0 0
    %125 = vmatpush1.bf16.msra.mxu0 0
    %126 = vmatprep.subr.bf16.mxu0 0
    %127 = vmatpush1.bf16.msra.mxu0 0
    %128 = vmatprep.subr.bf16.mxu0 0
    %129 = vmatpush1.bf16.msra.mxu0 0
    %130 = vmatprep.subr.bf16.mxu0 0
    %131 = vmatpush1.bf16.msra.mxu0 0
    %132 = vmatprep.subr.bf16.mxu0 0
    %133 = vmatpush1.bf16.msra.mxu0 0
    %134 = vmatprep.subr.bf16.mxu0 0
    %135 = vmatpush1.bf16.msra.mxu0 0
    %136 = vmatprep.subr.bf16.mxu0 0
    %137 = vmatpush1.bf16.msra.mxu0 0
    %138 = vmatprep.subr.bf16.mxu0 0
    %139 = vmatpush1.bf16.msra.mxu0 0
    %140 = vmatprep.subr.bf16.mxu0 0
    %141 = vmatpush1.bf16.msra.mxu0 0
    %142 = vmatprep.subr.bf16.mxu0 0
    %143 = vmatpush1.bf16.msra.mxu0 0
    %144 = vmatprep.mubr.bf16.mxu0 0
    %145 = vmatmul.mubr.bf16.gmra.mrb[0].mxu0 %v110
    %v146 = vpop.f32.mrb[0].mxu0
    %v147 = vadd.f32 %v94, %v146
    %v148 = vpop.f32.mrb[0].mxu0
    %v149 = vpop.f32.mrb[0].mxu0
    %v150 = vpop.f32.mrb[0].mxu0
    %151 = vdwg.mxu0
    %vm152 = vcmask 64512
    %153 = vst.msk [vmem:[#allocation2] sm:$0xff] %vm152, %v147
    // Predicated region
    $region22: #{two_layer_nn.1} parent=1 // pred_check
      _
    $region23: #{two_layer_nn.1} parent=1 // pred_check_branch
      %155 = sbr.rel (0) target = $region25
    $region24: #{two_layer_nn.1} parent=1 // pred_region
      %s157 = ssub.s32 128, 128
      %158 = vsyncadd [#allocation3], %s157
      %s160 = sshll.u32 [#allocation2], 4
      %s161 = int_to_ptr.vmem [resolvable:$true] %s160
      %163 = dma.vmem_to_hbm [thread:$0]  %s161, 128, %s5, [#allocation3]
    $region25: #{two_layer_nn.1} parent=1 // pred_fallthru
      _
    // Predicated region
    $region26: #{two_layer_nn.1} parent=1 // pred_check
      _
    $region27: #{two_layer_nn.1} parent=1 // pred_check_branch
      %165 = sbr.rel (0) target = $region29
    $region28: #{two_layer_nn.1} parent=1 // pred_region
      %166 = dma.done [#allocation3], 128
    $region29: #{two_layer_nn.1} parent=1 // pred_fallthru
      _
    %167 = vsyncpa [#allocation3], 1

</llo_original>
